<compile_context>
chip_gen: v5e
topology: v5e:2x2
jax: 0.10.0
libtpu: 0.0.40
codegen_flags: <defaults>
</compile_context>

<pallas_src>
import functools
import math

import jax
import jax.numpy as jnp
from jax.experimental import pallas as pl
from jax.experimental.pallas import tpu as pltpu

# Smallest normal f32.  TPUs flush denormals, so the PyTorch 1e-45 guard only
# ever catches exactly-zero norms; this threshold is equivalent on TPU.
_F32_SMALLEST_NORMAL = 1.1754944e-38


def _sphere_kernel(v_ref, x_ref, o_ref, *, radius):
    v = v_ref[...].astype(jnp.float32)
    x = x_ref[...].astype(jnp.float32)        # (rows, n) or (1, n) shared base

    # frame(): remove the component of v along x (tangent-space projection).
    proj = jnp.sum(v * x, axis=-1, keepdims=True)
    v = v - proj * x

    # Exponential map on the sphere.
    vnorm = jnp.sqrt(jnp.sum(v * v, axis=-1, keepdims=True))
    small = vnorm < _F32_SMALLEST_NORMAL
    safe = jnp.where(small, 1.0, vnorm)
    # Exact divide: HBM-bound kernel, the approx reciprocal saves nothing and
    # costs ~1e-3 relative error.
    sinc = jnp.where(small, 1.0, jnp.sin(vnorm) / safe)

    # Fold radius into the per-row scalars; epilogue is one full-width pass.
    rc = radius * jnp.cos(vnorm)
    rs = radius * sinc
    o_ref[...] = (rc * x + rs * v).astype(o_ref.dtype)


def _min_sublane(dtype):
    itemsize = jnp.dtype(dtype).itemsize
    return {4: 8, 2: 16, 1: 32}.get(itemsize, 8)


def _choose_row_tile(batch, n, dtype, vmem_budget_bytes=12 << 20):
    """Largest batch tile whose 3 streams x 2 pipeline buffers fit a budget that
    is safe on every generation (v5e 16 MiB default scoped VMEM -> raised to
    32 MiB below; v7x 64 MiB physical)."""
    itemsize = jnp.dtype(dtype).itemsize
    sub = _min_sublane(dtype)
    # Whole problem resident even if double-buffered: one block, no per-step
    # overhead, no pipeline prologue/epilogue (important on 1-TC v5e/v6e).
    if 6 * batch * n * itemsize <= vmem_budget_bytes:
        return batch
    # Streaming path: ~2 MiB/stream tiles (4096 rows at n=128, f32) amortize the
    # ~0.35 us per-grid-step overhead; large batches naturally give >= 4 blocks
    # so v7x can shard the grid across its two TensorCores.
    max_rows = (vmem_budget_bytes // (6 * n * itemsize)) // sub * sub
    return int(max(sub, min(max_rows, batch)))


def _batch_dim_semantics(grid_rows):
    # Only CORE_PARALLEL actually shards a grid axis across v7x's two
    # TensorCores; plain "parallel" is the safe (near-no-op) default elsewhere.
    try:
        kind = jax.devices()[0].device_kind.lower()
    except Exception:
        kind = ""
    if "v7" in kind and grid_rows >= 2 and grid_rows % 2 == 0:
        return (pltpu.CORE_PARALLEL,)
    return ("parallel",)


def sphere_forward(v, base, radius=1.0, *, row_tile=None):
    """v: (..., n).  base: same shape as v, or a single shared point ((n,) /
    leading size-1 dims).  Returns radius * exp_map_base(frame(base, v))."""
    assert v.ndim >= 1 and base.shape[-1] == v.shape[-1]
    n = int(v.shape[-1])
    batch = max(1, math.prod(v.shape[:-1]))
    v2 = v.reshape(batch, n)

    base_batch = max(1, math.prod(base.shape[:-1]))
    shared_base = (base_batch == 1 and batch > 1)
    if shared_base:
        x2 = base.reshape(1, n)                 # streamed once per block
    else:
        assert math.prod(base.shape) == batch * n, \
            "base must match v's shape or be a single shared point"
        x2 = base.reshape(batch, n)

    sub = _min_sublane(v.dtype)
    if row_tile is None:
        row_tile = _choose_row_tile(batch, n, v.dtype)
    else:
        # Round a user-supplied tile to a sublane multiple (or the full batch)
        # so the BlockSpec satisfies Mosaic's (8,128)/full-dim rule.
        row_tile = int(row_tile)
        row_tile = batch if row_tile >= batch else max(sub, (row_tile // sub) * sub)
    row_tile = max(1, min(row_tile, batch))

    grid_rows = pl.cdiv(batch, row_tile)
    # If row_tile does not divide batch, the last block is ragged: Pallas masks
    # the out-of-bounds rows on the output write, and the map is purely
    # row-wise, so no wrapper-side pad/slice (extra HBM round trips) is needed.

    base_spec = (pl.BlockSpec((1, n), lambda i: (0, 0)) if shared_base
                 else pl.BlockSpec((row_tile, n), lambda i: (i, 0)))

    kernel = functools.partial(_sphere_kernel, radius=float(radius))
    out = pl.pallas_call(
        kernel,
        out_shape=jax.ShapeDtypeStruct((batch, n), v.dtype),
        grid_spec=pltpu.PrefetchScalarGridSpec(
            num_scalar_prefetch=0,
            grid=(grid_rows,),
            in_specs=[pl.BlockSpec((row_tile, n), lambda i: (i, 0)), base_spec],
            out_specs=pl.BlockSpec((row_tile, n), lambda i: (i, 0)),
        ),
        compiler_params=pltpu.CompilerParams(
            dimension_semantics=_batch_dim_semantics(grid_rows),
            # Holds the double-buffered tiles everywhere: raises v5e's 16 MiB
            # default scoped limit, stays well under v7x's 64 MiB physical VMEM.
            vmem_limit_bytes=32 * 1024 * 1024,
        ),
    )(v2, x2)

    return out.reshape(v.shape)


# ---- parameter / input setup (plain JAX glue) -------------------------------

def uniform_init_sphere(key, shape, r=1.0, dtype=jnp.float32):
    """Mirror of uniform_init_sphere_: normal sample, normalize last dim, scale by r."""
    x = jax.random.normal(key, shape, dtype=dtype)
    norm = jnp.linalg.norm(x, axis=-1, keepdims=True)
    return r * x / norm


def sphere_forward_ref(v, base, radius=1.0):
    """Pure-JAX reference matching the PyTorch module (base broadcasts over batch)."""
    proj = jnp.sum(v * base, axis=-1, keepdims=True)
    v = v - proj * base
    vnorm = jnp.linalg.norm(v, axis=-1, keepdims=True)
    small = jnp.abs(vnorm) < _F32_SMALLEST_NORMAL
    safe = jnp.where(small, 1.0, vnorm)
    sinc = jnp.where(small, 1.0, jnp.sin(vnorm) / safe)
    return radius * (jnp.cos(vnorm) * base + sinc * v)


if __name__ == "__main__":
    radius = 1.5
    key = jax.random.PRNGKey(0)
    k_base, k_v, k2, k3 = jax.random.split(key, 4)

    # --- Sphere(size=(16, 128), radius=1.5): tensorial_size=(16,), n=128 -----
    # Tiny problem -> single resident block (grid=(1,)), no pads / slices.
    base = uniform_init_sphere(k_base, (16, 128))
    v = jax.random.normal(k_v, (16, 128), dtype=jnp.float32)
    out = jax.block_until_ready(sphere_forward(v, base, radius=radius))
    ref = sphere_forward_ref(v, base, radius=radius)
    assert out.shape == (16, 128)
    assert jnp.allclose(out, ref, atol=1e-5, rtol=1e-5), "mismatch vs reference (16x128)"

    # --- Low-dimensional sphere, extra batch dims, n not a multiple of 128 ---
    # The block's last dim is the full feature size, so no lane pad is needed.
    kb2, kv2 = jax.random.split(k2)
    base_s = uniform_init_sphere(kb2, (2, 3, 20))
    v_s = jax.random.normal(kv2, (2, 3, 20), dtype=jnp.float32)
    out_s = jax.block_until_ready(sphere_forward(v_s, base_s, radius=radius))
    ref_s = sphere_forward_ref(v_s, base_s, radius=radius)
    assert out_s.shape == (2, 3, 20)
    assert jnp.allclose(out_s, ref_s, atol=1e-5, rtol=1e-5), "mismatch vs reference (2x3x20)"

    # --- Shared base point + forced multi-block streaming path (grid=(4,)) ---
    kb3, kv3 = jax.random.split(k3)
    base_shared = uniform_init_sphere(kb3, (96,))
    v_t = jax.random.normal(kv3, (64, 96), dtype=jnp.float32)
    out_t = jax.block_until_ready(
        sphere_forward(v_t, base_shared, radius=radius, row_tile=16))
    ref_t = sphere_forward_ref(v_t, base_shared, radius=radius)
    assert out_t.shape == (64, 96)
    assert jnp.allclose(out_t, ref_t, atol=1e-5, rtol=1e-5), "mismatch vs reference (shared/tiled)"

    print("KERNEL_OK")
</pallas_src>

<mosaic_0001>
module attributes {stable_mosaic.version = 11 : i64} {
  func.func @_sphere_kernel(%arg0: i32, %arg1: memref<16x128xf32, #tpu.memory_space<vmem>>, %arg2: memref<16x128xf32, #tpu.memory_space<vmem>>, %arg3: memref<16x128xf32, #tpu.memory_space<vmem>>) attributes {dimension_semantics = [#tpu.dimension_semantics<parallel>], iteration_bounds = array<i64: 1>, scalar_prefetch = 0 : i64, scratch_operands = 0 : i64, tpu.core_type = #tpu.core_type<tc>, window_params = [{transform_indices = @transform_0, window_bounds = array<i64: 16, 128>}, {transform_indices = @transform_1, window_bounds = array<i64: 16, 128>}, {transform_indices = @transform_2, window_bounds = array<i64: 16, 128>}]} {
    %c0 = arith.constant 0 : index
    %c0_0 = arith.constant 0 : index
    %0 = vector.load %arg1[%c0, %c0_0] : memref<16x128xf32, #tpu.memory_space<vmem>>, vector<16x128xf32>
    %c0_1 = arith.constant 0 : index
    %c0_2 = arith.constant 0 : index
    %1 = vector.load %arg2[%c0_1, %c0_2] : memref<16x128xf32, #tpu.memory_space<vmem>>, vector<16x128xf32>
    %2 = arith.mulf %0, %1 : vector<16x128xf32>
    %cst = arith.constant dense<0.000000e+00> : vector<16xf32>
    %3 = vector.multi_reduction <add>, %2, %cst [1] : vector<16x128xf32> to vector<16xf32>
    %4 = vector.shape_cast %3 : vector<16xf32> to vector<16x1xf32>
    %5 = vector.broadcast %4 : vector<16x1xf32> to vector<16x128xf32>
    %6 = arith.mulf %5, %1 : vector<16x128xf32>
    %7 = arith.subf %0, %6 : vector<16x128xf32>
    %8 = arith.mulf %7, %7 : vector<16x128xf32>
    %cst_3 = arith.constant dense<0.000000e+00> : vector<16xf32>
    %9 = vector.multi_reduction <add>, %8, %cst_3 [1] : vector<16x128xf32> to vector<16xf32>
    %10 = vector.shape_cast %9 : vector<16xf32> to vector<16x1xf32>
    %11 = math.sqrt %10 : vector<16x1xf32>
    %cst_4 = arith.constant 1.17549435E-38 : f32
    %12 = vector.broadcast %cst_4 : f32 to vector<16x1xf32>
    %13 = arith.cmpf olt, %11, %12 : vector<16x1xf32>
    %cst_5 = arith.constant 1.000000e+00 : f32
    %14 = vector.broadcast %cst_5 : f32 to vector<16x1xf32>
    %15 = arith.select %13, %14, %11 : vector<16x1xi1>, vector<16x1xf32>
    %16 = math.sin %11 : vector<16x1xf32>
    %17 = arith.divf %16, %15 : vector<16x1xf32>
    %cst_6 = arith.constant 1.000000e+00 : f32
    %18 = vector.broadcast %cst_6 : f32 to vector<16x1xf32>
    %19 = arith.select %13, %18, %17 : vector<16x1xi1>, vector<16x1xf32>
    %20 = math.cos %11 : vector<16x1xf32>
    %cst_7 = arith.constant 1.500000e+00 : f32
    %21 = vector.broadcast %cst_7 : f32 to vector<16x1xf32>
    %22 = arith.mulf %21, %20 : vector<16x1xf32>
    %cst_8 = arith.constant 1.500000e+00 : f32
    %23 = vector.broadcast %cst_8 : f32 to vector<16x1xf32>
    %24 = arith.mulf %23, %19 : vector<16x1xf32>
    %25 = vector.broadcast %22 : vector<16x1xf32> to vector<16x128xf32>
    %26 = arith.mulf %25, %1 : vector<16x128xf32>
    %27 = vector.broadcast %24 : vector<16x1xf32> to vector<16x128xf32>
    %28 = arith.mulf %27, %7 : vector<16x128xf32>
    %29 = arith.addf %26, %28 : vector<16x128xf32>
    %c0_9 = arith.constant 0 : index
    %c0_10 = arith.constant 0 : index
    %30 = vector.load %arg3[%c0_9, %c0_10] : memref<16x128xf32, #tpu.memory_space<vmem>>, vector<16x128xf32>
    tpu.vector_store %arg3[%c0_9, %c0_10], %29 {strides = array<i32>} : memref<16x128xf32, #tpu.memory_space<vmem>>, vector<16x128xf32>,
    return
  }
  func.func @transform_0(%arg0: i32) -> (i32, i32) {
    %c0_i32 = arith.constant 0 : i32
    %c0_i32_0 = arith.constant 0 : i32
    return %arg0, %c0_i32 : i32, i32
  }
  func.func @transform_1(%arg0: i32) -> (i32, i32) {
    %c0_i32 = arith.constant 0 : i32
    %c0_i32_0 = arith.constant 0 : i32
    return %arg0, %c0_i32 : i32, i32
  }
  func.func @transform_2(%arg0: i32) -> (i32, i32) {
    %c0_i32 = arith.constant 0 : i32
    %c0_i32_0 = arith.constant 0 : i32
    return %arg0, %c0_i32 : i32, i32
  }
}

</mosaic_0001>

<llo_original>
// kernel: tpu_custom_call.1
$region0: #{tpu_custom_call.1}
  #allocation0 [shape = 'u32[]', space=smem, size = 0x4, offset = 0x4, fixed_abs, tag = 'smem constant byte address 0x4 - core index']
  #allocation1 [shape = 'u32[72,128]{1,0:T(1,128)}', space=vmem, size = 0x9000, scoped, tag = 'internal scratch']
  %s0 = inlined_call_operand.hbm [shape: f32[16,128], index: 0, kind: input, shape index: {}]
  %s1 = inlined_call_operand.hbm [shape: f32[16,128], index: 1, kind: input, shape index: {}]
  %s2 = inlined_call_operand.hbm [shape: f32[16,128], index: 2, kind: output, shape index: {}]
  %s3 = sld [smem:[#allocation0]]
  $region26: #{tpu_custom_call.1} parent=0
    _
  %s5 = ssub.s32 1, %s3
  %s6 = scalar_select 0, %s5, %s3
  $region1: #{tpu_custom_call.1} parent=0
    #allocation2 [shape = 'u8[8192]{0}', space=vmem, size = 0x2000, scoped, tag = 'input window, operand 0, single buffered']
    #allocation3 [shape = 's32[1]{0}', space=sflag, size = 0x4, scoped, tag = 'scoped memory for tpu_custom_call.1']
    #allocation4 [shape = 's32[1]{0}', space=sflag, size = 0x4, scoped, tag = 'scoped memory for tpu_custom_call.1']
    #allocation5 [shape = 'u8[8192]{0}', space=vmem, size = 0x2000, scoped, tag = 'input window, operand 1, single buffered']
    #allocation6 [shape = 's32[1]{0}', space=sflag, size = 0x4, scoped, tag = 'scoped memory for tpu_custom_call.1']
    #allocation7 [shape = 'u8[8192]{0}', space=vmem, size = 0x2000, scoped, tag = 'output window, operand 0, single buffered']
    %7 = vsyncpa [#allocation3], 0
    %8 = vsyncpa [#allocation6], 0
    %9 = vsyncpa [#allocation4], 0
    // Predicated region
    $region2: #{tpu_custom_call.1} parent=1 // pred_check
      _
    $region3: #{tpu_custom_call.1} parent=1 // pred_check_branch
      %11 = sbr.rel (0) target = $region5
    $region4: #{tpu_custom_call.1} parent=1 // pred_region
      %13 = vsyncadd [#allocation3], 0
      %s14 = sshll.u32 %s0, 4
      %s15 = int_to_ptr.hbm [resolvable:$true] %s14
      %s16 = sshll.u32 [#allocation2], 4
      %s17 = int_to_ptr.vmem [resolvable:$true] %s16
      %22 = dma.hbm_to_vmem [thread:$0]  %s15, 256, %s17, [#allocation3], 128, 128, 8
    $region5: #{tpu_custom_call.1} parent=1 // pred_fallthru
      _
    // Predicated region
    $region6: #{tpu_custom_call.1} parent=1 // pred_check
      _
    $region7: #{tpu_custom_call.1} parent=1 // pred_check_branch
      %24 = sbr.rel (0) target = $region9
    $region8: #{tpu_custom_call.1} parent=1 // pred_region
      %26 = vsyncadd [#allocation6], 0
      %s27 = sshll.u32 %s1, 4
      %s28 = int_to_ptr.hbm [resolvable:$true] %s27
      %s29 = sshll.u32 [#allocation5], 4
      %s30 = int_to_ptr.vmem [resolvable:$true] %s29
      %35 = dma.hbm_to_vmem [thread:$0]  %s28, 256, %s30, [#allocation6], 128, 128, 8
    $region9: #{tpu_custom_call.1} parent=1 // pred_fallthru
      _
    // Predicated region
    $region10: #{tpu_custom_call.1} parent=1 // pred_check
      _
    $region11: #{tpu_custom_call.1} parent=1 // pred_check_branch
      %37 = sbr.rel (0) target = $region13
    $region12: #{tpu_custom_call.1} parent=1 // pred_region
      %39 = dma.done [#allocation3], 256
    $region13: #{tpu_custom_call.1} parent=1 // pred_fallthru
      _
    // Predicated region
    $region14: #{tpu_custom_call.1} parent=1 // pred_check
      _
    $region15: #{tpu_custom_call.1} parent=1 // pred_check_branch
      %41 = sbr.rel (0) target = $region17
    $region16: #{tpu_custom_call.1} parent=1 // pred_region
      %43 = dma.done [#allocation6], 256
    $region17: #{tpu_custom_call.1} parent=1 // pred_fallthru
      _
    %v44 = vld [vmem:[#allocation2] sm:$0xff]
    %v45 = vld [vmem:[#allocation2 + $0x8] sm:$0xff]
    %v46 = vld [vmem:[#allocation5] sm:$0xff]
    %v47 = vld [vmem:[#allocation5 + $0x8] sm:$0xff]
    %v48 = vmul.f32 %v44, %v46
    %v49 = vmul.f32 %v45, %v47
    %50 = vadd.xlane.f32.xlu0 %v48
    %v51 = vpop.xlane.xlu0 %50
    %52 = vadd.xlane.f32.xlu0 %v49
    %v53 = vpop.xlane.xlu0 %52
    %v54 = vmul.f32 %v51, %v46
    %v55 = vmul.f32 %v53, %v47
    %v56 = vsub.f32 %v44, %v54
    %v57 = vsub.f32 %v45, %v55
    %v58 = vmul.f32 %v56, %v56
    %v59 = vmul.f32 %v57, %v57
    %60 = vadd.xlane.f32.xlu0 %v58
    %v61 = vpop.xlane.xlu0 %60
    %62 = vadd.xlane.f32.xlu0 %v59
    %v63 = vpop.xlane.xlu0 %62
    %v64 = vrsqrt.pop %v61
    %v65 = vmul.f32 %v64, %v61
    %v66 = vmul.f32 %v65, %v64
    %v67 = vmul.f32 0.5, %v66
    %v68 = vsub.f32 1.5, %v67
    %v69 = vmul.f32 %v64, %v68
    %v70 = vmul.f32 %v61, %v69
    %vm71 = vcmp.eq.f32.partialorder %v61, inf
    %v72 = vsel %vm71, %v61, %v70
    %vm73 = vcmp.eq.f32.partialorder %v61, 0.0
    %v74 = vand.u32 %v61, 2147483648
    %v75 = vsel %vm73, %v74, %v72
    %v76 = vrsqrt.pop %v63
    %v77 = vmul.f32 %v76, %v63
    %v78 = vmul.f32 %v77, %v76
    %v79 = vmul.f32 0.5, %v78
    %v80 = vsub.f32 1.5, %v79
    %v81 = vmul.f32 %v76, %v80
    %v82 = vmul.f32 %v63, %v81
    %vm83 = vcmp.eq.f32.partialorder %v63, inf
    %v84 = vsel %vm83, %v63, %v82
    %vm85 = vcmp.eq.f32.partialorder %v63, 0.0
    %v86 = vand.u32 %v63, 2147483648
    %v87 = vsel %vm85, %v86, %v84
    %vm88 = vcmp.lt.f32.partialorder %v75, 1.1754944e-38
    %vm89 = vcmp.lt.f32.partialorder %v87, 1.1754944e-38
    %v90 = vsel %vm88, 1.0, %v75
    %v91 = vsel %vm89, 1.0, %v87
    %v92 = vand.u32 2147483647, %v75
    %vm93 = vcmp.le.f32.partialorder %v92, 0.7853982
    %vm94 = vcmp.lt.s32.totalorder %v75, 0
    %v95 = vand.u32 %v75, 2139095040
    %v96 = vshrl.u32 %v95, 23
    %v97 = vsub.s32 %v96, 127
    %v98 = vand.u32 2147483647, %v75
    %v99 = vand.u32 %v98, 8388607
    %v100 = vor.u32 %v99, 8388608
    %v101 = vsub.s32 0, %v100
    %v102 = vadd.s32 %v97, 1
    %vm103 = vcmp.gt.s32.totalorder %v102, 0
    %v104 = vsel %vm103, %v102, 0
    %v105 = vshrl.u32 %v104, 5
    %v106 = vand.u32 %v104, 31
    %v107 = vsub.s32 32, %v106
    %v108 = vshrl.u32 683565275, %v107
    %v109 = vshll.u32 683565275, %v106
    %v110 = vshrl.u32 2475754826, %v107
    %v111 = vor.u32 %v109, %v110
    %v112 = vshll.u32 2475754826, %v106
    %v113 = vshrl.u32 2131351028, %v107
    %v114 = vor.u32 %v112, %v113
    %v115 = vshll.u32 2131351028, %v106
    %v116 = vshrl.u32 2102212464, %v107
    %v117 = vor.u32 %v115, %v116
    %v118 = vshll.u32 2102212464, %v106
    %v119 = vshrl.u32 920167782, %v107
    %v120 = vor.u32 %v118, %v119
    %v121 = vshll.u32 920167782, %v106
    %v122 = vshrl.u32 1326507024, %v107
    %v123 = vor.u32 %v121, %v122
    %vm124 = vcmp.lt.s32.totalorder %v105, 1
    %vm125 = vcmp.lt.s32.totalorder %v105, 2
    %vm126 = vcmp.lt.s32.totalorder %v105, 3
    %vm127 = vcmp.lt.s32.totalorder %v105, 4
    %v128 = vsel %vm124, %v108, %v111
    %v129 = vsel %vm127, %v117, 2102212464
    %v130 = vsel %vm126, %v114, %v129
    %v131 = vsel %vm125, %v128, %v130
    %v132 = vsel %vm124, %v111, %v114
    %v133 = vsel %vm127, %v120, 920167782
    %v134 = vsel %vm126, %v117, %v133
    %v135 = vsel %vm125, %v132, %v134
    %v136 = vsel %vm124, %v114, %v117
    %v137 = vsel %vm127, %v123, 1326507024
    %v138 = vsel %vm126, %v120, %v137
    %v139 = vsel %vm125, %v136, %v138
    %v140 = vshll.u32 %v100, 8
    %v141 = vand.u32 %v140, 65535
    %v142 = vshrl.u32 %v140, 16
    %v143 = vand.u32 %v139, 65535
    %v144 = vshrl.u32 %v139, 16
    %v145 = vmul.u32 %v141, %v143
    %v146 = vmul.u32 %v141, %v144
    %v147 = vmul.u32 %v142, %v143
    %v148 = vmul.u32 %v142, %v144
    %v149 = vshll.u32 %v146, 16
    %v150 = vshrl.u32 %v146, 16
    %v151 = vshll.u32 %v147, 16
    %v152 = vshrl.u32 %v147, 16
    %vm153 = vc.u32 %v145, %v149
    %v154 = vsel %vm153, 1, 0
    %v155 = vadd.s32 %v145, %v149
    %v156 = vadd.s32 %v148, %v154
    %vm157 = vc.u32 %v155, %v151
    %v158 = vsel %vm157, 1, 0
    %v159 = vadd.s32 %v155, %v151
    %v160 = vadd.s32 %v156, %v158
    %v161 = vadd.s32 %v160, %v150
    %v162 = vadd.s32 %v161, %v152
    %v163 = vand.u32 %v140, 65535
    %v164 = vshrl.u32 %v140, 16
    %v165 = vand.u32 %v135, 65535
    %v166 = vshrl.u32 %v135, 16
    %v167 = vmul.u32 %v163, %v165
    %v168 = vmul.u32 %v163, %v166
    %v169 = vmul.u32 %v164, %v165
    %v170 = vmul.u32 %v164, %v166
    %v171 = vshll.u32 %v168, 16
    %v172 = vshrl.u32 %v168, 16
    %v173 = vshll.u32 %v169, 16
    %v174 = vshrl.u32 %v169, 16
    %vm175 = vc.u32 %v167, %v171
    %v176 = vsel %vm175, 1, 0
    %v177 = vadd.s32 %v167, %v171
    %v178 = vadd.s32 %v170, %v176
    %vm179 = vc.u32 %v177, %v173
    %v180 = vsel %vm179, 1, 0
    %v181 = vadd.s32 %v177, %v173
    %v182 = vadd.s32 %v178, %v180
    %v183 = vadd.s32 %v182, %v172
    %v184 = vadd.s32 %v183, %v174
    %v185 = vmul.u32 %v140, %v131
    %v186 = vadd.s32 %v162, %v181
    %vm187 = vc.u32 %v162, %v181
    %v188 = vadd.s32 %v184, 1
    %v189 = vsel %vm187, %v188, %v184
    %v190 = vadd.s32 %v185, %v189
    %v191 = vadd.s32 %v190, 536870912
    %v192 = vshrl.u32 %v191, 30
    %v193 = vshll.u32 %v192, 30
    %v194 = vsub.s32 %v190, %v193
    %vm195 = vcmp.lt.s32.totalorder %v194, 0
    %v196 = vsub.s32 0, %v194
    %v197 = vsel %vm195, %v196, %v194
    %v198 = vclz %v197
    %v199 = vsub.s32 %v198, 2
    %vm200 = vcmp.gt.s32.totalorder 0, %v199
    %v201 = vsel %vm200, 0, %v199
    %v202 = vsub.s32 32, %v201
    %v203 = vshll.u32 %v194, %v201
    %v204 = vshrl.u32 %v186, %v202
    %v205 = vor.u32 %v203, %v204
    %v206 = vsub.s32 4294967266, %v201
    %v207 = vadd.s32 %v206, 127
    %v208 = vshll.u32 %v207, 23
    %v209 = vor.u32 4788187, %v208
    %v210 = vand.u32 2147483647, %v209
    %v212 = vcvt.s32.f32 %v205
    %v213 = vmul.f32 %v212, %v210
    %v214 = vxor.u32 %v213, 2147483648
    %v215 = vsel %vm94, %v214, %v213
    %v216 = vsub.s32 4, %v192
    %v217 = vsel %vm94, %v216, %v192
    %v218 = vsel %vm93, %v75, %v215
    %v219 = vsel %vm93, 0, %v217
    %v220 = vmul.f32 %v218, %v218
    %v221 = vmul.f32 %v220, -0.001358992
    %v222 = vadd.f32 %v221, 0.041655596
    %v223 = vmul.f32 %v220, %v222
    %v224 = vadd.f32 %v223, -0.4999988
    %v225 = vmul.f32 %v220, %v224
    %v226 = vadd.f32 1.0, %v225
    %v227 = vmul.f32 %v218, %v218
    %v228 = vmul.f32 %v227, -0.00019511016
    %v229 = vadd.f32 %v228, 0.008332121
    %v230 = vmul.f32 %v227, %v229
    %v231 = vadd.f32 %v230, -0.16666654
    %v232 = vmul.f32 %v227, %v231
    %v233 = vadd.f32 %v232, 1.0
    %v234 = vmul.f32 %v233, %v218
    %vm235 = vweird.f32 %v75
    %v236 = vadd.s32 %v219, 3
    %v237 = vand.u32 %v236, 3
    %vm238 = vcmp.lt.s32.totalorder %v237, 2
    %vm239 = vcmp.eq.s32.totalorder %v237, 0
    %v240 = vxor.u32 %v234, 2147483648
    %v241 = vsel %vm239, %v226, %v240
    %vm242 = vcmp.eq.s32.totalorder %v237, 2
    %v243 = vxor.u32 %v226, 2147483648
    %v244 = vsel %vm242, %v243, %v234
    %v245 = vsel %vm238, %v241, %v244
    %v246 = vsel %vm235, nan, %v245
    %v247 = vand.u32 2147483647, %v87
    %vm248 = vcmp.le.f32.partialorder %v247, 0.7853982
    %vm249 = vcmp.lt.s32.totalorder %v87, 0
    %v250 = vand.u32 %v87, 2139095040
    %v251 = vshrl.u32 %v250, 23
    %v252 = vsub.s32 %v251, 127
    %v253 = vand.u32 2147483647, %v87
    %v254 = vand.u32 %v253, 8388607
    %v255 = vor.u32 %v254, 8388608
    %v256 = vsub.s32 0, %v255
    %v257 = vadd.s32 %v252, 1
    %vm258 = vcmp.gt.s32.totalorder %v257, 0
    %v259 = vsel %vm258, %v257, 0
    %v260 = vshrl.u32 %v259, 5
    %v261 = vand.u32 %v259, 31
    %v262 = vsub.s32 32, %v261
    %v263 = vshrl.u32 683565275, %v262
    %v264 = vshll.u32 683565275, %v261
    %v265 = vshrl.u32 2475754826, %v262
    %v266 = vor.u32 %v264, %v265
    %v267 = vshll.u32 2475754826, %v261
    %v268 = vshrl.u32 2131351028, %v262
    %v269 = vor.u32 %v267, %v268
    %v270 = vshll.u32 2131351028, %v261
    %v271 = vshrl.u32 2102212464, %v262
    %v272 = vor.u32 %v270, %v271
    %v273 = vshll.u32 2102212464, %v261
    %v274 = vshrl.u32 920167782, %v262
    %v275 = vor.u32 %v273, %v274
    %v276 = vshll.u32 920167782, %v261
    %v277 = vshrl.u32 1326507024, %v262
    %v278 = vor.u32 %v276, %v277
    %vm279 = vcmp.lt.s32.totalorder %v260, 1
    %vm280 = vcmp.lt.s32.totalorder %v260, 2
    %vm281 = vcmp.lt.s32.totalorder %v260, 3
    %vm282 = vcmp.lt.s32.totalorder %v260, 4
    %v283 = vsel %vm279, %v263, %v266
    %v284 = vsel %vm282, %v272, 2102212464
    %v285 = vsel %vm281, %v269, %v284
    %v286 = vsel %vm280, %v283, %v285
    %v287 = vsel %vm279, %v266, %v269
    %v288 = vsel %vm282, %v275, 920167782
    %v289 = vsel %vm281, %v272, %v288
    %v290 = vsel %vm280, %v287, %v289
    %v291 = vsel %vm279, %v269, %v272
    %v292 = vsel %vm282, %v278, 1326507024
    %v293 = vsel %vm281, %v275, %v292
    %v294 = vsel %vm280, %v291, %v293
    %v295 = vshll.u32 %v255, 8
    %v296 = vand.u32 %v295, 65535
    %v297 = vshrl.u32 %v295, 16
    %v298 = vand.u32 %v294, 65535
    %v299 = vshrl.u32 %v294, 16
    %v300 = vmul.u32 %v296, %v298
    %v301 = vmul.u32 %v296, %v299
    %v302 = vmul.u32 %v297, %v298
    %v303 = vmul.u32 %v297, %v299
    %v304 = vshll.u32 %v301, 16
    %v305 = vshrl.u32 %v301, 16
    %v306 = vshll.u32 %v302, 16
    %v307 = vshrl.u32 %v302, 16
    %vm308 = vc.u32 %v300, %v304
    %v309 = vsel %vm308, 1, 0
    %v310 = vadd.s32 %v300, %v304
    %v311 = vadd.s32 %v303, %v309
    %vm312 = vc.u32 %v310, %v306
    %v313 = vsel %vm312, 1, 0
    %v314 = vadd.s32 %v310, %v306
    %v315 = vadd.s32 %v311, %v313
    %v316 = vadd.s32 %v315, %v305
    %v317 = vadd.s32 %v316, %v307
    %v318 = vand.u32 %v295, 65535
    %v319 = vshrl.u32 %v295, 16
    %v320 = vand.u32 %v290, 65535
    %v321 = vshrl.u32 %v290, 16
    %v322 = vmul.u32 %v318, %v320
    %v323 = vmul.u32 %v318, %v321
    %v324 = vmul.u32 %v319, %v320
    %v325 = vmul.u32 %v319, %v321
    %v326 = vshll.u32 %v323, 16
    %v327 = vshrl.u32 %v323, 16
    %v328 = vshll.u32 %v324, 16
    %v329 = vshrl.u32 %v324, 16
    %vm330 = vc.u32 %v322, %v326
    %v331 = vsel %vm330, 1, 0
    %v332 = vadd.s32 %v322, %v326
    %v333 = vadd.s32 %v325, %v331
    %vm334 = vc.u32 %v332, %v328
    %v335 = vsel %vm334, 1, 0
    %v336 = vadd.s32 %v332, %v328
    %v337 = vadd.s32 %v333, %v335
    %v338 = vadd.s32 %v337, %v327
    %v339 = vadd.s32 %v338, %v329
    %v340 = vmul.u32 %v295, %v286
    %v341 = vadd.s32 %v317, %v336
    %vm342 = vc.u32 %v317, %v336
    %v343 = vadd.s32 %v339, 1
    %v344 = vsel %vm342, %v343, %v339
    %v345 = vadd.s32 %v340, %v344
    %v346 = vadd.s32 %v345, 536870912
    %v347 = vshrl.u32 %v346, 30
    %v348 = vshll.u32 %v347, 30
    %v349 = vsub.s32 %v345, %v348
    %vm350 = vcmp.lt.s32.totalorder %v349, 0
    %v351 = vsub.s32 0, %v349
    %v352 = vsel %vm350, %v351, %v349
    %v353 = vclz %v352
    %v354 = vsub.s32 %v353, 2
    %vm355 = vcmp.gt.s32.totalorder 0, %v354
    %v356 = vsel %vm355, 0, %v354
    %v357 = vsub.s32 32, %v356
    %v358 = vshll.u32 %v349, %v356
    %v359 = vshrl.u32 %v341, %v357
    %v360 = vor.u32 %v358, %v359
    %v361 = vsub.s32 4294967266, %v356
    %v362 = vadd.s32 %v361, 127
    %v363 = vshll.u32 %v362, 23
    %v364 = vor.u32 4788187, %v363
    %v365 = vand.u32 2147483647, %v364
    %v367 = vcvt.s32.f32 %v360
    %v368 = vmul.f32 %v367, %v365
    %v369 = vxor.u32 %v368, 2147483648
    %v370 = vsel %vm249, %v369, %v368
    %v371 = vsub.s32 4, %v347
    %v372 = vsel %vm249, %v371, %v347
    %v373 = vsel %vm248, %v87, %v370
    %v374 = vsel %vm248, 0, %v372
    %v375 = vmul.f32 %v373, %v373
    %v376 = vmul.f32 %v375, -0.001358992
    %v377 = vadd.f32 %v376, 0.041655596
    %v378 = vmul.f32 %v375, %v377
    %v379 = vadd.f32 %v378, -0.4999988
    %v380 = vmul.f32 %v375, %v379
    %v381 = vadd.f32 1.0, %v380
    %v382 = vmul.f32 %v373, %v373
    %v383 = vmul.f32 %v382, -0.00019511016
    %v384 = vadd.f32 %v383, 0.008332121
    %v385 = vmul.f32 %v382, %v384
    %v386 = vadd.f32 %v385, -0.16666654
    %v387 = vmul.f32 %v382, %v386
    %v388 = vadd.f32 %v387, 1.0
    %v389 = vmul.f32 %v388, %v373
    %vm390 = vweird.f32 %v87
    %v391 = vadd.s32 %v374, 3
    %v392 = vand.u32 %v391, 3
    %vm393 = vcmp.lt.s32.totalorder %v392, 2
    %vm394 = vcmp.eq.s32.totalorder %v392, 0
    %v395 = vxor.u32 %v389, 2147483648
    %v396 = vsel %vm394, %v381, %v395
    %vm397 = vcmp.eq.s32.totalorder %v392, 2
    %v398 = vxor.u32 %v381, 2147483648
    %v399 = vsel %vm397, %v398, %v389
    %v400 = vsel %vm393, %v396, %v399
    %v401 = vsel %vm390, nan, %v400
    %v402 = vrcp.pop %v90
    %v403 = vmul.f32 %v90, %v402
    %v404 = vsub.f32 1.0, %v403
    %v405 = vmul.f32 %v402, %v404
    %v406 = vadd.f32 %v402, %v405
    %vm407 = vweird.f32 %v90
    %vm408 = vweird.f32 %v402
    %vm409 = vmor %vm407, %vm408
    %v410 = vsel %vm409, %v402, %v406
    %v411 = vand.u32 2147483647, %v90
    %vm412 = vcmp.eq.f32.partialorder %v411, 8.507059e+37
    %v413 = vand.u32 %v90, 2147483648
    %v414 = vor.u32 1.1754944e-38, %v413
    %v415 = vsel %vm412, %v414, %v410
    %v416 = vmul.f32 %v246, %v415
    %v417 = vrcp.pop %v91
    %v418 = vmul.f32 %v91, %v417
    %v419 = vsub.f32 1.0, %v418
    %v420 = vmul.f32 %v417, %v419
    %v421 = vadd.f32 %v417, %v420
    %vm422 = vweird.f32 %v91
    %vm423 = vweird.f32 %v417
    %vm424 = vmor %vm422, %vm423
    %v425 = vsel %vm424, %v417, %v421
    %v426 = vand.u32 2147483647, %v91
    %vm427 = vcmp.eq.f32.partialorder %v426, 8.507059e+37
    %v428 = vand.u32 %v91, 2147483648
    %v429 = vor.u32 1.1754944e-38, %v428
    %v430 = vsel %vm427, %v429, %v425
    %v431 = vmul.f32 %v401, %v430
    %v432 = vsel %vm88, 1.0, %v416
    %v433 = vsel %vm89, 1.0, %v431
    %v434 = vand.u32 2147483647, %v75
    %vm435 = vcmp.le.f32.partialorder %v434, 0.7853982
    %vm436 = vcmp.lt.s32.totalorder %v75, 0
    %v437 = vand.u32 %v75, 2139095040
    %v438 = vshrl.u32 %v437, 23
    %v439 = vsub.s32 %v438, 127
    %v440 = vand.u32 2147483647, %v75
    %v441 = vand.u32 %v440, 8388607
    %v442 = vor.u32 %v441, 8388608
    %v443 = vsub.s32 0, %v442
    %v444 = vadd.s32 %v439, 1
    %vm445 = vcmp.gt.s32.totalorder %v444, 0
    %v446 = vsel %vm445, %v444, 0
    %v447 = vshrl.u32 %v446, 5
    %v448 = vand.u32 %v446, 31
    %v449 = vsub.s32 32, %v448
    %v450 = vshrl.u32 683565275, %v449
    %v451 = vshll.u32 683565275, %v448
    %v452 = vshrl.u32 2475754826, %v449
    %v453 = vor.u32 %v451, %v452
    %v454 = vshll.u32 2475754826, %v448
    %v455 = vshrl.u32 2131351028, %v449
    %v456 = vor.u32 %v454, %v455
    %v457 = vshll.u32 2131351028, %v448
    %v458 = vshrl.u32 2102212464, %v449
    %v459 = vor.u32 %v457, %v458
    %v460 = vshll.u32 2102212464, %v448
    %v461 = vshrl.u32 920167782, %v449
    %v462 = vor.u32 %v460, %v461
    %v463 = vshll.u32 920167782, %v448
    %v464 = vshrl.u32 1326507024, %v449
    %v465 = vor.u32 %v463, %v464
    %vm466 = vcmp.lt.s32.totalorder %v447, 1
    %vm467 = vcmp.lt.s32.totalorder %v447, 2
    %vm468 = vcmp.lt.s32.totalorder %v447, 3
    %vm469 = vcmp.lt.s32.totalorder %v447, 4
    %v470 = vsel %vm466, %v450, %v453
    %v471 = vsel %vm469, %v459, 2102212464
    %v472 = vsel %vm468, %v456, %v471
    %v473 = vsel %vm467, %v470, %v472
    %v474 = vsel %vm466, %v453, %v456
    %v475 = vsel %vm469, %v462, 920167782
    %v476 = vsel %vm468, %v459, %v475
    %v477 = vsel %vm467, %v474, %v476
    %v478 = vsel %vm466, %v456, %v459
    %v479 = vsel %vm469, %v465, 1326507024
    %v480 = vsel %vm468, %v462, %v479
    %v481 = vsel %vm467, %v478, %v480
    %v482 = vshll.u32 %v442, 8
    %v483 = vand.u32 %v482, 65535
    %v484 = vshrl.u32 %v482, 16
    %v485 = vand.u32 %v481, 65535
    %v486 = vshrl.u32 %v481, 16
    %v487 = vmul.u32 %v483, %v485
    %v488 = vmul.u32 %v483, %v486
    %v489 = vmul.u32 %v484, %v485
    %v490 = vmul.u32 %v484, %v486
    %v491 = vshll.u32 %v488, 16
    %v492 = vshrl.u32 %v488, 16
    %v493 = vshll.u32 %v489, 16
    %v494 = vshrl.u32 %v489, 16
    %vm495 = vc.u32 %v487, %v491
    %v496 = vsel %vm495, 1, 0
    %v497 = vadd.s32 %v487, %v491
    %v498 = vadd.s32 %v490, %v496
    %vm499 = vc.u32 %v497, %v493
    %v500 = vsel %vm499, 1, 0
    %v501 = vadd.s32 %v497, %v493
    %v502 = vadd.s32 %v498, %v500
    %v503 = vadd.s32 %v502, %v492
    %v504 = vadd.s32 %v503, %v494
    %v505 = vand.u32 %v482, 65535
    %v506 = vshrl.u32 %v482, 16
    %v507 = vand.u32 %v477, 65535
    %v508 = vshrl.u32 %v477, 16
    %v509 = vmul.u32 %v505, %v507
    %v510 = vmul.u32 %v505, %v508
    %v511 = vmul.u32 %v506, %v507
    %v512 = vmul.u32 %v506, %v508
    %v513 = vshll.u32 %v510, 16
    %v514 = vshrl.u32 %v510, 16
    %v515 = vshll.u32 %v511, 16
    %v516 = vshrl.u32 %v511, 16
    %vm517 = vc.u32 %v509, %v513
    %v518 = vsel %vm517, 1, 0
    %v519 = vadd.s32 %v509, %v513
    %v520 = vadd.s32 %v512, %v518
    %vm521 = vc.u32 %v519, %v515
    %v522 = vsel %vm521, 1, 0
    %v523 = vadd.s32 %v519, %v515
    %v524 = vadd.s32 %v520, %v522
    %v525 = vadd.s32 %v524, %v514
    %v526 = vadd.s32 %v525, %v516
    %v527 = vmul.u32 %v482, %v473
    %v528 = vadd.s32 %v504, %v523
    %vm529 = vc.u32 %v504, %v523
    %v530 = vadd.s32 %v526, 1
    %v531 = vsel %vm529, %v530, %v526
    %v532 = vadd.s32 %v527, %v531
    %v533 = vadd.s32 %v532, 536870912
    %v534 = vshrl.u32 %v533, 30
    %v535 = vshll.u32 %v534, 30
    %v536 = vsub.s32 %v532, %v535
    %vm537 = vcmp.lt.s32.totalorder %v536, 0
    %v538 = vsub.s32 0, %v536
    %v539 = vsel %vm537, %v538, %v536
    %v540 = vclz %v539
    %v541 = vsub.s32 %v540, 2
    %vm542 = vcmp.gt.s32.totalorder 0, %v541
    %v543 = vsel %vm542, 0, %v541
    %v544 = vsub.s32 32, %v543
    %v545 = vshll.u32 %v536, %v543
    %v546 = vshrl.u32 %v528, %v544
    %v547 = vor.u32 %v545, %v546
    %v548 = vsub.s32 4294967266, %v543
    %v549 = vadd.s32 %v548, 127
    %v550 = vshll.u32 %v549, 23
    %v551 = vor.u32 4788187, %v550
    %v552 = vand.u32 2147483647, %v551
    %v554 = vcvt.s32.f32 %v547
    %v555 = vmul.f32 %v554, %v552
    %v556 = vxor.u32 %v555, 2147483648
    %v557 = vsel %vm436, %v556, %v555
    %v558 = vsub.s32 4, %v534
    %v559 = vsel %vm436, %v558, %v534
    %v560 = vsel %vm435, %v75, %v557
    %v561 = vsel %vm435, 0, %v559
    %v562 = vmul.f32 %v560, %v560
    %v563 = vmul.f32 %v562, -0.001358992
    %v564 = vadd.f32 %v563, 0.041655596
    %v565 = vmul.f32 %v562, %v564
    %v566 = vadd.f32 %v565, -0.4999988
    %v567 = vmul.f32 %v562, %v566
    %v568 = vadd.f32 1.0, %v567
    %v569 = vmul.f32 %v560, %v560
    %v570 = vmul.f32 %v569, -0.00019511016
    %v571 = vadd.f32 %v570, 0.008332121
    %v572 = vmul.f32 %v569, %v571
    %v573 = vadd.f32 %v572, -0.16666654
    %v574 = vmul.f32 %v569, %v573
    %v575 = vadd.f32 %v574, 1.0
    %v576 = vmul.f32 %v575, %v560
    %vm577 = vweird.f32 %v75
    %v578 = vand.u32 %v561, 3
    %vm579 = vcmp.lt.s32.totalorder %v578, 2
    %vm580 = vcmp.eq.s32.totalorder %v578, 0
    %v581 = vxor.u32 %v576, 2147483648
    %v582 = vsel %vm580, %v568, %v581
    %vm583 = vcmp.eq.s32.totalorder %v578, 2
    %v584 = vxor.u32 %v568, 2147483648
    %v585 = vsel %vm583, %v584, %v576
    %v586 = vsel %vm579, %v582, %v585
    %v587 = vsel %vm577, nan, %v586
    %v588 = vand.u32 2147483647, %v87
    %vm589 = vcmp.le.f32.partialorder %v588, 0.7853982
    %vm590 = vcmp.lt.s32.totalorder %v87, 0
    %v591 = vand.u32 %v87, 2139095040
    %v592 = vshrl.u32 %v591, 23
    %v593 = vsub.s32 %v592, 127
    %v594 = vand.u32 2147483647, %v87
    %v595 = vand.u32 %v594, 8388607
    %v596 = vor.u32 %v595, 8388608
    %v597 = vsub.s32 0, %v596
    %v598 = vadd.s32 %v593, 1
    %vm599 = vcmp.gt.s32.totalorder %v598, 0
    %v600 = vsel %vm599, %v598, 0
    %v601 = vshrl.u32 %v600, 5
    %v602 = vand.u32 %v600, 31
    %v603 = vsub.s32 32, %v602
    %v604 = vshrl.u32 683565275, %v603
    %v605 = vshll.u32 683565275, %v602
    %v606 = vshrl.u32 2475754826, %v603
    %v607 = vor.u32 %v605, %v606
    %v608 = vshll.u32 2475754826, %v602
    %v609 = vshrl.u32 2131351028, %v603
    %v610 = vor.u32 %v608, %v609
    %v611 = vshll.u32 2131351028, %v602
    %v612 = vshrl.u32 2102212464, %v603
    %v613 = vor.u32 %v611, %v612
    %v614 = vshll.u32 2102212464, %v602
    %v615 = vshrl.u32 920167782, %v603
    %v616 = vor.u32 %v614, %v615
    %v617 = vshll.u32 920167782, %v602
    %v618 = vshrl.u32 1326507024, %v603
    %v619 = vor.u32 %v617, %v618
    %vm620 = vcmp.lt.s32.totalorder %v601, 1
    %vm621 = vcmp.lt.s32.totalorder %v601, 2
    %vm622 = vcmp.lt.s32.totalorder %v601, 3
    %vm623 = vcmp.lt.s32.totalorder %v601, 4
    %v624 = vsel %vm620, %v604, %v607
    %v625 = vsel %vm623, %v613, 2102212464
    %v626 = vsel %vm622, %v610, %v625
    %v627 = vsel %vm621, %v624, %v626
    %v628 = vsel %vm620, %v607, %v610
    %v629 = vsel %vm623, %v616, 920167782
    %v630 = vsel %vm622, %v613, %v629
    %v631 = vsel %vm621, %v628, %v630
    %v632 = vsel %vm620, %v610, %v613
    %v633 = vsel %vm623, %v619, 1326507024
    %v634 = vsel %vm622, %v616, %v633
    %v635 = vsel %vm621, %v632, %v634
    %v636 = vshll.u32 %v596, 8
    %v637 = vand.u32 %v636, 65535
    %v638 = vshrl.u32 %v636, 16
    %v639 = vand.u32 %v635, 65535
    %v640 = vshrl.u32 %v635, 16
    %v641 = vmul.u32 %v637, %v639
    %v642 = vmul.u32 %v637, %v640
    %v643 = vmul.u32 %v638, %v639
    %v644 = vmul.u32 %v638, %v640
    %v645 = vshll.u32 %v642, 16
    %v646 = vshrl.u32 %v642, 16
    %v647 = vshll.u32 %v643, 16
    %v648 = vshrl.u32 %v643, 16
    %vm649 = vc.u32 %v641, %v645
    %v650 = vsel %vm649, 1, 0
    %v651 = vadd.s32 %v641, %v645
    %v652 = vadd.s32 %v644, %v650
    %vm653 = vc.u32 %v651, %v647
    %v654 = vsel %vm653, 1, 0
    %v655 = vadd.s32 %v651, %v647
    %v656 = vadd.s32 %v652, %v654
    %v657 = vadd.s32 %v656, %v646
    %v658 = vadd.s32 %v657, %v648
    %v659 = vand.u32 %v636, 65535
    %v660 = vshrl.u32 %v636, 16
    %v661 = vand.u32 %v631, 65535
    %v662 = vshrl.u32 %v631, 16
    %v663 = vmul.u32 %v659, %v661
    %v664 = vmul.u32 %v659, %v662
    %v665 = vmul.u32 %v660, %v661
    %v666 = vmul.u32 %v660, %v662
    %v667 = vshll.u32 %v664, 16
    %v668 = vshrl.u32 %v664, 16
    %v669 = vshll.u32 %v665, 16
    %v670 = vshrl.u32 %v665, 16
    %vm671 = vc.u32 %v663, %v667
    %v672 = vsel %vm671, 1, 0
    %v673 = vadd.s32 %v663, %v667
    %v674 = vadd.s32 %v666, %v672
    %vm675 = vc.u32 %v673, %v669
    %v676 = vsel %vm675, 1, 0
    %v677 = vadd.s32 %v673, %v669
    %v678 = vadd.s32 %v674, %v676
    %v679 = vadd.s32 %v678, %v668
    %v680 = vadd.s32 %v679, %v670
    %v681 = vmul.u32 %v636, %v627
    %v682 = vadd.s32 %v658, %v677
    %vm683 = vc.u32 %v658, %v677
    %v684 = vadd.s32 %v680, 1
    %v685 = vsel %vm683, %v684, %v680
    %v686 = vadd.s32 %v681, %v685
    %v687 = vadd.s32 %v686, 536870912
    %v688 = vshrl.u32 %v687, 30
    %v689 = vshll.u32 %v688, 30
    %v690 = vsub.s32 %v686, %v689
    %vm691 = vcmp.lt.s32.totalorder %v690, 0
    %v692 = vsub.s32 0, %v690
    %v693 = vsel %vm691, %v692, %v690
    %v694 = vclz %v693
    %v695 = vsub.s32 %v694, 2
    %vm696 = vcmp.gt.s32.totalorder 0, %v695
    %v697 = vsel %vm696, 0, %v695
    %v698 = vsub.s32 32, %v697
    %v699 = vshll.u32 %v690, %v697
    %v700 = vshrl.u32 %v682, %v698
    %v701 = vor.u32 %v699, %v700
    %v702 = vsub.s32 4294967266, %v697
    %v703 = vadd.s32 %v702, 127
    %v704 = vshll.u32 %v703, 23
    %v705 = vor.u32 4788187, %v704
    %v706 = vand.u32 2147483647, %v705
    %v708 = vcvt.s32.f32 %v701
    %v709 = vmul.f32 %v708, %v706
    %v710 = vxor.u32 %v709, 2147483648
    %v711 = vsel %vm590, %v710, %v709
    %v712 = vsub.s32 4, %v688
    %v713 = vsel %vm590, %v712, %v688
    %v714 = vsel %vm589, %v87, %v711
    %v715 = vsel %vm589, 0, %v713
    %v716 = vmul.f32 %v714, %v714
    %v717 = vmul.f32 %v716, -0.001358992
    %v718 = vadd.f32 %v717, 0.041655596
    %v719 = vmul.f32 %v716, %v718
    %v720 = vadd.f32 %v719, -0.4999988
    %v721 = vmul.f32 %v716, %v720
    %v722 = vadd.f32 1.0, %v721
    %v723 = vmul.f32 %v714, %v714
    %v724 = vmul.f32 %v723, -0.00019511016
    %v725 = vadd.f32 %v724, 0.008332121
    %v726 = vmul.f32 %v723, %v725
    %v727 = vadd.f32 %v726, -0.16666654
    %v728 = vmul.f32 %v723, %v727
    %v729 = vadd.f32 %v728, 1.0
    %v730 = vmul.f32 %v729, %v714
    %vm731 = vweird.f32 %v87
    %v732 = vand.u32 %v715, 3
    %vm733 = vcmp.lt.s32.totalorder %v732, 2
    %vm734 = vcmp.eq.s32.totalorder %v732, 0
    %v735 = vxor.u32 %v730, 2147483648
    %v736 = vsel %vm734, %v722, %v735
    %vm737 = vcmp.eq.s32.totalorder %v732, 2
    %v738 = vxor.u32 %v722, 2147483648
    %v739 = vsel %vm737, %v738, %v730
    %v740 = vsel %vm733, %v736, %v739
    %v741 = vsel %vm731, nan, %v740
    %v742 = vmul.f32 %v587, 1.5
    %v743 = vmul.f32 %v741, 1.5
    %v744 = vmul.f32 %v432, 1.5
    %v745 = vmul.f32 %v433, 1.5
    %v746 = vmul.f32 %v742, %v46
    %v747 = vmul.f32 %v743, %v47
    %v748 = vmul.f32 %v744, %v56
    %v749 = vmul.f32 %v745, %v57
    %v750 = vadd.f32 %v746, %v748
    %v751 = vadd.f32 %v747, %v749
    %752 = vst [vmem:[#allocation7] sm:$0xff] %v750
    %753 = vst [vmem:[#allocation7 + $0x8] sm:$0xff] %v751
    // Predicated region
    $region18: #{tpu_custom_call.1} parent=1 // pred_check
      _
    $region19: #{tpu_custom_call.1} parent=1 // pred_check_branch
      %755 = sbr.rel (0) target = $region21
    $region20: #{tpu_custom_call.1} parent=1 // pred_region
      %757 = vsyncadd [#allocation4], 0
      %s758 = sshll.u32 [#allocation7], 4
      %s759 = int_to_ptr.vmem [resolvable:$true] %s758
      %s760 = sshll.u32 %s2, 4
      %s761 = int_to_ptr.hbm [resolvable:$true] %s760
      %766 = dma.vmem_to_hbm [thread:$0]  %s759, 256, %s761, [#allocation4], 128, 128, 8
    $region21: #{tpu_custom_call.1} parent=1 // pred_fallthru
      _
    // Predicated region
    $region22: #{tpu_custom_call.1} parent=1 // pred_check
      _
    $region23: #{tpu_custom_call.1} parent=1 // pred_check_branch
      %768 = sbr.rel (0) target = $region25
    $region24: #{tpu_custom_call.1} parent=1 // pred_region
      %770 = dma.done [#allocation4], 256
    $region25: #{tpu_custom_call.1} parent=1 // pred_fallthru
      _
    %771 = vsyncpa [#allocation3], 1
    %772 = vsyncpa [#allocation6], 1
    %773 = vsyncpa [#allocation4], 1

</llo_original>
